<compile_context>
chip_gen: v6e
topology: v6e:2x2x1
jax: 0.10.0
libtpu: 0.0.40
codegen_flags: <defaults>
</compile_context>

<pallas_src>
import functools
import math

import jax
import jax.numpy as jnp
from jax.experimental import pallas as pl
from jax.experimental.pallas import tpu as pltpu

# Exact weights from the module's __init__ (used for the reference check).
_GAUSS_5x5 = [
    [0.00296902, 0.01330621, 0.02193823, 0.01330621, 0.00296902],
    [0.01330621, 0.05963430, 0.09832033, 0.05963430, 0.01330621],
    [0.02193823, 0.09832033, 0.16210282, 0.09832033, 0.02193823],
    [0.01330621, 0.05963430, 0.09832033, 0.05963430, 0.01330621],
    [0.00296902, 0.01330621, 0.02193823, 0.01330621, 0.00296902],
]

# 1-D separable factors derived from the module's own constants so that
# outer([a,b,c,b,a], [a,b,c,b,a]) reproduces the 5x5 matrix to ~3e-8 per tap.
_C0 = math.sqrt(0.16210282)
_K_A = 0.02193823 / _C0
_K_B = 0.09832033 / _C0
_K_C = _C0


def _blur_kernel(col_ref, x_ref, o_ref, *, w):
    """One grid step: blur TN flattened images, entirely in vregs.

    col_ref: (1, HW) int32, col_ref[0, p] = p % W  (column index inside a row)
    x_ref  : (TN, HW) input block (one H*W image per sublane row; lane-dense)
    o_ref  : (TN, HW) output block
    """
    tn, hw = o_ref.shape
    x = x_ref[...].astype(jnp.float32)        # single f32 cast
    col = col_ref[...]                        # (1, HW); broadcasts over batch

    a, b, c = _K_A, _K_B, _K_C
    zpad = jnp.zeros((tn, 2 * w), jnp.float32)

    def tap(vp, s):
        # vp = [zeros(2W) | v | zeros(2W)] along lanes; tap(vp, s)[p] == v[p+s]
        # with zero fill outside the flattened image.  Static lane-offset
        # slices of a vreg-resident value: no VMEM traffic.
        return vp[:, 2 * w + s: 2 * w + s + hw]

    # Horizontal 5-tap pass (within each image row).  Taps that would cross a
    # row boundary inside the flattened image are masked off via the column id.
    xp = jnp.concatenate([zpad, x, zpad], axis=1)
    h = (c * x
         + b * (jnp.where(col >= 1, tap(xp, -1), 0.0)
                + jnp.where(col <= w - 2, tap(xp, 1), 0.0))
         + a * (jnp.where(col >= 2, tap(xp, -2), 0.0)
                + jnp.where(col <= w - 3, tap(xp, 2), 0.0)))

    # Vertical 5-tap pass: one image row == a flat shift of W, and the zero
    # padding of hp is exactly the conv's zero padding above/below the image,
    # so no masks are needed here.
    hp = jnp.concatenate([zpad, h, zpad], axis=1)
    out = (c * h
           + b * (tap(hp, -w) + tap(hp, w))
           + a * (tap(hp, -2 * w) + tap(hp, 2 * w)))

    o_ref[...] = out.astype(o_ref.dtype)      # single cast back, lane-dense store


def _vmem_limit_bytes():
    # Explicit scoped-VMEM limit (review): ~half of physical VMEM, capped at
    # 64 MiB.  v5e/v6e: 128 MiB -> 64 MiB; v7x: 64 MiB per TensorCore -> 32 MiB.
    try:
        cap = pltpu.get_tpu_info().vmem_capacity_bytes
    except Exception:
        cap = 128 * 1024 * 1024
    return int(min(cap // 2, 64 * 1024 * 1024))


def _pick_tile_n(n, hw, itemsize, budget):
    """Images per grid step.  The per-step working set is only the
    double-buffered input+output blocks (all intermediates live in vregs)."""
    per_img = hw * itemsize * 2 * 2           # in + out blocks, double-buffered
    cap = max(1, budget // max(per_img, 1))
    if n <= cap:
        return n                              # one step carries the whole batch
    # When tiling N, the block's second-minor dim must be a multiple of 8.
    cands = [t for t in range(8, min(cap, n) + 1, 8) if n % t == 0]
    if not cands:
        return n                              # correctness first: one big block
    best = max(cands)
    # Prefer an even number of grid steps (v7x: 2 TensorCores, "parallel" axis)
    # when it does not cost more than 2x in tile size.
    even = [t for t in cands if (n // t) % 2 == 0]
    if even and max(even) * 2 >= best:
        return max(even)
    return best


def gaussian_blur(x):
    """x: (N, 1, H, W) float array (NCHW, like the PyTorch module)."""
    N, C, H, W = x.shape
    assert C == 1, "GaussianBlur weight has in_channels=1"
    HW = H * W

    x2 = x.reshape(N, HW)                     # free, row-major contiguous
    # Column index map (p % W), built once on the host side; fetched once by
    # the pipeline (constant block index) and broadcast inside the kernel.
    col_ids = jnp.tile(jnp.arange(W, dtype=jnp.int32), H).reshape(1, HW)

    vmem_limit = _vmem_limit_bytes()
    tn = _pick_tile_n(N, HW, x.dtype.itemsize, vmem_limit // 2)
    assert N % tn == 0, "tile size must divide the batch"

    kernel = functools.partial(_blur_kernel, w=W)

    out = pl.pallas_call(
        kernel,
        out_shape=jax.ShapeDtypeStruct((N, HW), x.dtype),
        grid=(N // tn,),
        in_specs=[
            pl.BlockSpec((1, HW), lambda b: (0, 0)),    # column-id map (constant)
            pl.BlockSpec((tn, HW), lambda b: (b, 0)),   # input images
        ],
        out_specs=pl.BlockSpec((tn, HW), lambda b: (b, 0)),
        compiler_params=pltpu.CompilerParams(
            dimension_semantics=("parallel",),
            vmem_limit_bytes=vmem_limit,
        ),
    )(col_ids, x2)
    return out.reshape(N, 1, H, W)


def _reference(x):
    # Pure-JAX reference: conv2d with the exact 5x5 weights, padding=2.
    w = jnp.asarray(_GAUSS_5x5, jnp.float32).reshape(1, 1, 5, 5)
    return jax.lax.conv_general_dilated(
        x.astype(jnp.float32), w, window_strides=(1, 1),
        padding=((2, 2), (2, 2)),
        dimension_numbers=("NCHW", "OIHW", "NCHW"),
    ).astype(x.dtype)


if __name__ == "__main__":
    key = jax.random.PRNGKey(0)

    # Primary case (matches the module's implied input: N=2, C=1, 16x16).
    x = jax.random.normal(key, (2, 1, 16, 16), dtype=jnp.float32)
    y = jax.block_until_ready(gaussian_blur(x))
    y_ref = _reference(x)
    assert y.shape == (2, 1, 16, 16)
    assert jnp.allclose(y, y_ref, atol=1e-5, rtol=1e-5)

    # Non-square sanity check (exercises the H != W flattened-index logic).
    x2 = jax.random.normal(jax.random.PRNGKey(1), (4, 1, 24, 16), dtype=jnp.float32)
    y2 = jax.block_until_ready(gaussian_blur(x2))
    assert jnp.allclose(y2, _reference(x2), atol=1e-5, rtol=1e-5)

    print("KERNEL_OK")
</pallas_src>

<mosaic_0001>
module attributes {stable_mosaic.version = 11 : i64} {
  func.func @_blur_kernel(%arg0: i32, %arg1: memref<1x256xi32, #tpu.memory_space<vmem>>, %arg2: memref<2x256xf32, #tpu.memory_space<vmem>>, %arg3: memref<2x256xf32, #tpu.memory_space<vmem>>) attributes {dimension_semantics = [#tpu.dimension_semantics<parallel>], iteration_bounds = array<i64: 1>, scalar_prefetch = 0 : i64, scratch_operands = 0 : i64, tpu.core_type = #tpu.core_type<tc>, window_params = [{pipeline_mode = #tpu.pipeline_mode<synchronous>, transform_indices = @transform_0, window_bounds = array<i64: 1, 256>}, {transform_indices = @transform_1, window_bounds = array<i64: 2, 256>}, {transform_indices = @transform_2, window_bounds = array<i64: 2, 256>}]} {
    %c0 = arith.constant 0 : index
    %c0_0 = arith.constant 0 : index
    %0 = vector.load %arg2[%c0, %c0_0] : memref<2x256xf32, #tpu.memory_space<vmem>>, vector<2x256xf32>
    %c0_1 = arith.constant 0 : index
    %c0_2 = arith.constant 0 : index
    %1 = vector.load %arg1[%c0_1, %c0_2] : memref<1x256xi32, #tpu.memory_space<vmem>>, vector<1x256xi32>
    %cst = arith.constant 0.000000e+00 : f32
    %2 = vector.broadcast %cst : f32 to vector<2x32xf32>
    %3 = tpu.concatenate %2, %0, %2 in 1 : vector<2x32xf32>, vector<2x256xf32>, vector<2x32xf32> -> vector<2x320xf32>
    %cst_3 = arith.constant 0.402619958 : f32
    %4 = vector.broadcast %cst_3 : f32 to vector<2x256xf32>
    %5 = arith.mulf %4, %0 : vector<2x256xf32>
    %c1_i32 = arith.constant 1 : i32
    %6 = vector.broadcast %c1_i32 : i32 to vector<1x256xi32>
    %7 = arith.cmpi sge, %1, %6 : vector<1x256xi32>
    %8 = vector.extract_strided_slice %3 {offsets = [0, 31], sizes = [2, 256], strides = [1, 1]} : vector<2x320xf32> to vector<2x256xf32>
    %cst_4 = arith.constant 0.000000e+00 : f32
    %9 = vector.shape_cast %7 : vector<1x256xi1> to vector<1x256xi1>
    %10 = vector.broadcast %9 : vector<1x256xi1> to vector<2x256xi1>
    %11 = vector.broadcast %cst_4 : f32 to vector<2x256xf32>
    %12 = arith.select %10, %8, %11 : vector<2x256xi1>, vector<2x256xf32>
    %c14_i32 = arith.constant 14 : i32
    %13 = vector.broadcast %c14_i32 : i32 to vector<1x256xi32>
    %14 = arith.cmpi sle, %1, %13 : vector<1x256xi32>
    %15 = vector.extract_strided_slice %3 {offsets = [0, 33], sizes = [2, 256], strides = [1, 1]} : vector<2x320xf32> to vector<2x256xf32>
    %cst_5 = arith.constant 0.000000e+00 : f32
    %16 = vector.shape_cast %14 : vector<1x256xi1> to vector<1x256xi1>
    %17 = vector.broadcast %16 : vector<1x256xi1> to vector<2x256xi1>
    %18 = vector.broadcast %cst_5 : f32 to vector<2x256xf32>
    %19 = arith.select %17, %15, %18 : vector<2x256xi1>, vector<2x256xf32>
    %20 = arith.addf %12, %19 : vector<2x256xf32>
    %cst_6 = arith.constant 0.244201347 : f32
    %21 = vector.broadcast %cst_6 : f32 to vector<2x256xf32>
    %22 = arith.mulf %21, %20 : vector<2x256xf32>
    %23 = arith.addf %5, %22 : vector<2x256xf32>
    %c2_i32 = arith.constant 2 : i32
    %24 = vector.broadcast %c2_i32 : i32 to vector<1x256xi32>
    %25 = arith.cmpi sge, %1, %24 : vector<1x256xi32>
    %26 = vector.extract_strided_slice %3 {offsets = [0, 30], sizes = [2, 256], strides = [1, 1]} : vector<2x320xf32> to vector<2x256xf32>
    %cst_7 = arith.constant 0.000000e+00 : f32
    %27 = vector.shape_cast %25 : vector<1x256xi1> to vector<1x256xi1>
    %28 = vector.broadcast %27 : vector<1x256xi1> to vector<2x256xi1>
    %29 = vector.broadcast %cst_7 : f32 to vector<2x256xf32>
    %30 = arith.select %28, %26, %29 : vector<2x256xi1>, vector<2x256xf32>
    %c13_i32 = arith.constant 13 : i32
    %31 = vector.broadcast %c13_i32 : i32 to vector<1x256xi32>
    %32 = arith.cmpi sle, %1, %31 : vector<1x256xi32>
    %33 = vector.extract_strided_slice %3 {offsets = [0, 34], sizes = [2, 256], strides = [1, 1]} : vector<2x320xf32> to vector<2x256xf32>
    %cst_8 = arith.constant 0.000000e+00 : f32
    %34 = vector.shape_cast %32 : vector<1x256xi1> to vector<1x256xi1>
    %35 = vector.broadcast %34 : vector<1x256xi1> to vector<2x256xi1>
    %36 = vector.broadcast %cst_8 : f32 to vector<2x256xf32>
    %37 = arith.select %35, %33, %36 : vector<2x256xi1>, vector<2x256xf32>
    %38 = arith.addf %30, %37 : vector<2x256xf32>
    %cst_9 = arith.constant 0.0544886813 : f32
    %39 = vector.broadcast %cst_9 : f32 to vector<2x256xf32>
    %40 = arith.mulf %39, %38 : vector<2x256xf32>
    %41 = arith.addf %23, %40 : vector<2x256xf32>
    %42 = tpu.concatenate %2, %41, %2 in 1 : vector<2x32xf32>, vector<2x256xf32>, vector<2x32xf32> -> vector<2x320xf32>
    %cst_10 = arith.constant 0.402619958 : f32
    %43 = vector.broadcast %cst_10 : f32 to vector<2x256xf32>
    %44 = arith.mulf %43, %41 : vector<2x256xf32>
    %45 = vector.extract_strided_slice %42 {offsets = [0, 16], sizes = [2, 256], strides = [1, 1]} : vector<2x320xf32> to vector<2x256xf32>
    %46 = vector.extract_strided_slice %42 {offsets = [0, 48], sizes = [2, 256], strides = [1, 1]} : vector<2x320xf32> to vector<2x256xf32>
    %47 = arith.addf %45, %46 : vector<2x256xf32>
    %cst_11 = arith.constant 0.244201347 : f32
    %48 = vector.broadcast %cst_11 : f32 to vector<2x256xf32>
    %49 = arith.mulf %48, %47 : vector<2x256xf32>
    %50 = arith.addf %44, %49 : vector<2x256xf32>
    %51 = vector.extract_strided_slice %42 {offsets = [0, 0], sizes = [2, 256], strides = [1, 1]} : vector<2x320xf32> to vector<2x256xf32>
    %52 = vector.extract_strided_slice %42 {offsets = [0, 64], sizes = [2, 256], strides = [1, 1]} : vector<2x320xf32> to vector<2x256xf32>
    %53 = arith.addf %51, %52 : vector<2x256xf32>
    %cst_12 = arith.constant 0.0544886813 : f32
    %54 = vector.broadcast %cst_12 : f32 to vector<2x256xf32>
    %55 = arith.mulf %54, %53 : vector<2x256xf32>
    %56 = arith.addf %50, %55 : vector<2x256xf32>
    %c0_13 = arith.constant 0 : index
    %c0_14 = arith.constant 0 : index
    %57 = vector.load %arg3[%c0_13, %c0_14] : memref<2x256xf32, #tpu.memory_space<vmem>>, vector<2x256xf32>
    tpu.vector_store %arg3[%c0_13, %c0_14], %56 {strides = array<i32>} : memref<2x256xf32, #tpu.memory_space<vmem>>, vector<2x256xf32>,
    return
  }
  func.func @transform_0(%arg0: i32) -> (i32, i32) {
    %c0_i32 = arith.constant 0 : i32
    %c0_i32_0 = arith.constant 0 : i32
    %c0_i32_1 = arith.constant 0 : i32
    return %c0_i32, %c0_i32_0 : i32, i32
  }
  func.func @transform_1(%arg0: i32) -> (i32, i32) {
    %c0_i32 = arith.constant 0 : i32
    %c0_i32_0 = arith.constant 0 : i32
    return %arg0, %c0_i32 : i32, i32
  }
  func.func @transform_2(%arg0: i32) -> (i32, i32) {
    %c0_i32 = arith.constant 0 : i32
    %c0_i32_0 = arith.constant 0 : i32
    return %arg0, %c0_i32 : i32, i32
  }
}

</mosaic_0001>

<llo_original>
// kernel: tpu_custom_call.1
$region0: #{tpu_custom_call.1}
  #allocation0 [shape = 'u32[]', space=smem, size = 0x4, offset = 0x4, fixed_abs, tag = 'smem constant byte address 0x4 - core index']
  #allocation1 [shape = 'u32[144,128]{1,0:T(1,128)}', space=vmem, size = 0x12000, scoped, tag = 'internal scratch']
  %s0 = inlined_call_operand.hbm [shape: s32[1,256], index: 0, kind: input, shape index: {}]
  %s1 = inlined_call_operand.hbm [shape: f32[2,256], index: 1, kind: input, shape index: {}]
  %s2 = inlined_call_operand.hbm [shape: f32[2,256], index: 2, kind: output, shape index: {}]
  %s3 = sld [smem:[#allocation0]]
  $region26: #{tpu_custom_call.1} parent=0
    _
  %s5 = ssub.s32 1, %s3
  %s6 = scalar_select 0, %s5, %s3
  $region1: #{tpu_custom_call.1} parent=0
    #allocation2 [shape = 'u8[1024]{0}', space=vmem, size = 0x400, scoped, tag = 'input window, operand 0, single buffered']
    #allocation3 [shape = 's32[1]{0}', space=sflag, size = 0x4, scoped, tag = 'scoped memory for tpu_custom_call.1']
    #allocation4 [shape = 's32[1]{0}', space=sflag, size = 0x4, scoped, tag = 'scoped memory for tpu_custom_call.1']
    #allocation5 [shape = 'u8[2048]{0}', space=vmem, size = 0x800, scoped, tag = 'input window, operand 1, single buffered']
    #allocation6 [shape = 's32[1]{0}', space=sflag, size = 0x4, scoped, tag = 'scoped memory for tpu_custom_call.1']
    #allocation7 [shape = 'u8[2048]{0}', space=vmem, size = 0x800, scoped, tag = 'output window, operand 0, single buffered']
    %7 = vsyncpa [#allocation3], 0
    %8 = vsyncpa [#allocation6], 0
    %9 = vsyncpa [#allocation4], 0
    // Predicated region
    $region2: #{tpu_custom_call.1} parent=1 // pred_check
      _
    $region3: #{tpu_custom_call.1} parent=1 // pred_check_branch
      %11 = sbr.rel (0) target = $region5
    $region4: #{tpu_custom_call.1} parent=1 // pred_region
      %s13 = ssub.s32 32, 32
      %14 = vsyncadd [#allocation3], %s13
      %s16 = sshll.u32 [#allocation2], 4
      %s17 = int_to_ptr.vmem [resolvable:$true] %s16
      %19 = dma.hbm_to_vmem [thread:$0]  %s0, 32, %s17, [#allocation3]
    $region5: #{tpu_custom_call.1} parent=1 // pred_fallthru
      _
    // Predicated region
    $region6: #{tpu_custom_call.1} parent=1 // pred_check
      _
    $region7: #{tpu_custom_call.1} parent=1 // pred_check_branch
      %21 = sbr.rel (0) target = $region9
    $region8: #{tpu_custom_call.1} parent=1 // pred_region
      %s23 = ssub.s32 64, 64
      %24 = vsyncadd [#allocation6], %s23
      %s26 = sshll.u32 [#allocation5], 4
      %s27 = int_to_ptr.vmem [resolvable:$true] %s26
      %29 = dma.hbm_to_vmem [thread:$0]  %s1, 64, %s27, [#allocation6]
    $region9: #{tpu_custom_call.1} parent=1 // pred_fallthru
      _
    // Predicated region
    $region10: #{tpu_custom_call.1} parent=1 // pred_check
      _
    $region11: #{tpu_custom_call.1} parent=1 // pred_check_branch
      %31 = sbr.rel (0) target = $region13
    $region12: #{tpu_custom_call.1} parent=1 // pred_region
      %32 = dma.done [#allocation3], 32
    $region13: #{tpu_custom_call.1} parent=1 // pred_fallthru
      _
    // Predicated region
    $region14: #{tpu_custom_call.1} parent=1 // pred_check
      _
    $region15: #{tpu_custom_call.1} parent=1 // pred_check_branch
      %34 = sbr.rel (0) target = $region17
    $region16: #{tpu_custom_call.1} parent=1 // pred_region
      %35 = dma.done [#allocation6], 64
    $region17: #{tpu_custom_call.1} parent=1 // pred_fallthru
      _
    %v36 = vld [vmem:[#allocation5] sm:$0xf]
    %v37 = vld [vmem:[#allocation2] sm:$0x3]
    %v40 = vunpack.c.l.s4 1983009808
    %v41 = vunpack.c.0.s8 %v40
    %v42 = vlaneseq
    %v43 = vshrl.u32 %v42, 7
    %v44 = vsub.s32 %v41, %v43
    %v45 = vrot.slane %v36, %v44
    %v46 = vcombine.high %v45, %v45
    %47 = vrot.lane.b32.xlu0 %v45, 32
    %v48 = vpop.permute.xlu0 %47
    %49 = vrot.lane.b32.xlu0 %v46, 32
    %v50 = vpop.permute.xlu0 %49
    %vm51 = vcmask 261120
    %v52 = vsel %vm51, %v48, %v50
    %v55 = vsel %vm51, 0.0, %v48
    %v56 = vsel %vm51, %v50, 0.0
    %v57 = vmul.f32 %v36, 0.40261996
    %vm58 = vcmp.ge.s32.totalorder %v37, 1
    %v59 = vsel %vm58, 1, 0
    %v60 = vlaneseq
    %v61 = vshrl.u32 %v60, 7
    %v62 = vsub.s32 0, %v61
    %v63 = vrot.slane %v59, %v62
    %v64 = vlaneseq
    %v65 = vshrl.u32 %v64, 7
    %v66 = vsub.s32 1, %v65
    %v67 = vrot.slane %v59, %v66
    %vm68 = vcmp.eq.s32.totalorder %v63, 1
    %vm69 = vcmp.eq.s32.totalorder %v67, 1
    %72 = vrot.lane.b32.xlu0 %v55, 97
    %v73 = vpop.permute.xlu0 %72
    %74 = vrot.lane.b32.xlu0 %v52, 97
    %v75 = vpop.permute.xlu0 %74
    %76 = vrot.lane.b32.xlu0 %v56, 97
    %v77 = vpop.permute.xlu0 %76
    %vm78 = vcmask 793600
    %v79 = vsel %vm78, %v73, %v75
    %v80 = vsel %vm78, %v75, %v77
    %v83 = vsel %vm68, %v79, 0.0
    %v84 = vsel %vm69, %v80, 0.0
    %vm85 = vcmp.le.s32.totalorder %v37, 14
    %v86 = vsel %vm85, 1, 0
    %v87 = vlaneseq
    %v88 = vshrl.u32 %v87, 7
    %v89 = vsub.s32 0, %v88
    %v90 = vrot.slane %v86, %v89
    %v91 = vlaneseq
    %v92 = vshrl.u32 %v91, 7
    %v93 = vsub.s32 1, %v92
    %v94 = vrot.slane %v86, %v93
    %vm95 = vcmp.eq.s32.totalorder %v90, 1
    %vm96 = vcmp.eq.s32.totalorder %v94, 1
    %97 = vrot.lane.b32.xlu0 %v55, 95
    %v98 = vpop.permute.xlu0 %97
    %99 = vrot.lane.b32.xlu0 %v52, 95
    %v100 = vpop.permute.xlu0 %99
    %101 = vrot.lane.b32.xlu0 %v56, 95
    %v102 = vpop.permute.xlu0 %101
    %vm103 = vcmask 777216
    %v104 = vsel %vm103, %v98, %v100
    %v105 = vsel %vm103, %v100, %v102
    %v108 = vsel %vm95, %v104, 0.0
    %v109 = vsel %vm96, %v105, 0.0
    %v110 = vadd.f32 %v83, %v108
    %v111 = vadd.f32 %v84, %v109
    %v112 = vmul.f32 %v110, 0.24420135
    %v113 = vmul.f32 %v111, 0.24420135
    %v116 = vcombine.low %v112, %v113
    %v118 = vunpack.c.l.s4 1983009808
    %v119 = vunpack.c.0.s8 %v118
    %v120 = vlaneseq
    %v121 = vshrl.u32 %v120, 7
    %v122 = vsub.s32 %v119, %v121
    %v123 = vrot.slane %v116, %v122
    %v125 = vadd.f32 %v57, %v123
    %vm126 = vcmp.ge.s32.totalorder %v37, 2
    %v127 = vsel %vm126, 1, 0
    %v128 = vlaneseq
    %v129 = vshrl.u32 %v128, 7
    %v130 = vsub.s32 0, %v129
    %v131 = vrot.slane %v127, %v130
    %v132 = vlaneseq
    %v133 = vshrl.u32 %v132, 7
    %v134 = vsub.s32 1, %v133
    %v135 = vrot.slane %v127, %v134
    %vm136 = vcmp.eq.s32.totalorder %v131, 1
    %vm137 = vcmp.eq.s32.totalorder %v135, 1
    %138 = vrot.lane.b32.xlu0 %v55, 98
    %v139 = vpop.permute.xlu0 %138
    %140 = vrot.lane.b32.xlu0 %v52, 98
    %v141 = vpop.permute.xlu0 %140
    %142 = vrot.lane.b32.xlu0 %v56, 98
    %v143 = vpop.permute.xlu0 %142
    %vm144 = vcmask 801792
    %v145 = vsel %vm144, %v139, %v141
    %v146 = vsel %vm144, %v141, %v143
    %v149 = vsel %vm136, %v145, 0.0
    %v150 = vsel %vm137, %v146, 0.0
    %vm151 = vcmp.le.s32.totalorder %v37, 13
    %v152 = vsel %vm151, 1, 0
    %v153 = vlaneseq
    %v154 = vshrl.u32 %v153, 7
    %v155 = vsub.s32 0, %v154
    %v156 = vrot.slane %v152, %v155
    %v157 = vlaneseq
    %v158 = vshrl.u32 %v157, 7
    %v159 = vsub.s32 1, %v158
    %v160 = vrot.slane %v152, %v159
    %vm161 = vcmp.eq.s32.totalorder %v156, 1
    %vm162 = vcmp.eq.s32.totalorder %v160, 1
    %163 = vrot.lane.b32.xlu0 %v55, 94
    %v164 = vpop.permute.xlu0 %163
    %165 = vrot.lane.b32.xlu0 %v52, 94
    %v166 = vpop.permute.xlu0 %165
    %167 = vrot.lane.b32.xlu0 %v56, 94
    %v168 = vpop.permute.xlu0 %167
    %vm169 = vcmask 769024
    %v170 = vsel %vm169, %v164, %v166
    %v171 = vsel %vm169, %v166, %v168
    %v174 = vsel %vm161, %v170, 0.0
    %v175 = vsel %vm162, %v171, 0.0
    %v176 = vadd.f32 %v149, %v174
    %v177 = vadd.f32 %v150, %v175
    %v178 = vmul.f32 %v176, 0.05448868
    %v179 = vmul.f32 %v177, 0.05448868
    %v182 = vcombine.low %v178, %v179
    %v184 = vunpack.c.l.s4 1983009808
    %v185 = vunpack.c.0.s8 %v184
    %v186 = vlaneseq
    %v187 = vshrl.u32 %v186, 7
    %v188 = vsub.s32 %v185, %v187
    %v189 = vrot.slane %v182, %v188
    %v191 = vadd.f32 %v125, %v189
    %v194 = vunpack.c.l.s4 1983009808
    %v195 = vunpack.c.0.s8 %v194
    %v196 = vlaneseq
    %v197 = vshrl.u32 %v196, 7
    %v198 = vsub.s32 %v195, %v197
    %v199 = vrot.slane %v191, %v198
    %v200 = vcombine.high %v199, %v199
    %201 = vrot.lane.b32.xlu0 %v199, 32
    %v202 = vpop.permute.xlu0 %201
    %203 = vrot.lane.b32.xlu0 %v200, 32
    %v204 = vpop.permute.xlu0 %203
    %v205 = vsel %vm51, %v202, %v204
    %v209 = vsel %vm51, 0.0, %v202
    %v210 = vsel %vm51, %v204, 0.0
    %v211 = vmul.f32 %v191, 0.40261996
    %214 = vrot.lane.b32.xlu0 %v209, 96
    %v215 = vpop.permute.xlu0 %214
    %216 = vrot.lane.b32.xlu0 %v205, 96
    %v217 = vpop.permute.xlu0 %216
    %218 = vrot.lane.b32.xlu0 %v210, 96
    %v219 = vpop.permute.xlu0 %218
    %vm220 = vcmask 785408
    %v221 = vsel %vm220, %v215, %v217
    %v222 = vsel %vm220, %v217, %v219
    %v226 = vadd.f32 %v209, %v221
    %v227 = vadd.f32 %v205, %v222
    %v228 = vadd.f32 %v210, %v219
    %v229 = vmul.f32 %v226, 0.24420135
    %v230 = vmul.f32 %v227, 0.24420135
    %v231 = vmul.f32 %v228, 0.24420135
    %v235 = vcombine.low %v229, %v230
    %v237 = vunpack.c.l.s4 1983009808
    %v238 = vunpack.c.0.s8 %v237
    %v239 = vlaneseq
    %v240 = vshrl.u32 %v239, 7
    %v241 = vsub.s32 %v238, %v240
    %v242 = vrot.slane %v235, %v241
    %v244 = vunpack.c.l.s4 1983009808
    %v245 = vunpack.c.0.s8 %v244
    %v246 = vlaneseq
    %v247 = vshrl.u32 %v246, 7
    %v248 = vsub.s32 %v245, %v247
    %v249 = vrot.slane %v231, %v248
    %v250 = vcombine.low %v242, %v249
    %251 = vrot.lane.b32.xlu0 %v250, 112
    %v252 = vpop.permute.xlu0 %251
    %v253 = vrot.slane %v252, 2
    %vm254 = vcmask 916480
    %v255 = vsel %vm254, %v252, %v253
    %v257 = vadd.f32 %v211, %v255
    %258 = vrot.lane.b32.xlu0 %v209, 64
    %v259 = vpop.permute.xlu0 %258
    %260 = vrot.lane.b32.xlu0 %v205, 64
    %v261 = vpop.permute.xlu0 %260
    %262 = vrot.lane.b32.xlu0 %v210, 64
    %v263 = vpop.permute.xlu0 %262
    %vm264 = vcmask 523264
    %v265 = vsel %vm264, %v259, %v261
    %v266 = vsel %vm264, %v261, %v263
    %v269 = vadd.f32 %v209, %v265
    %v270 = vadd.f32 %v205, %v266
    %v271 = vmul.f32 %v269, 0.05448868
    %v272 = vmul.f32 %v270, 0.05448868
    %v275 = vcombine.low %v271, %v272
    %v277 = vunpack.c.l.s4 1983009808
    %v278 = vunpack.c.0.s8 %v277
    %v279 = vlaneseq
    %v280 = vshrl.u32 %v279, 7
    %v281 = vsub.s32 %v278, %v280
    %v282 = vrot.slane %v275, %v281
    %v284 = vadd.f32 %v257, %v282
    %285 = vst [vmem:[#allocation7] sm:$0xf] %v284
    // Predicated region
    $region18: #{tpu_custom_call.1} parent=1 // pred_check
      _
    $region19: #{tpu_custom_call.1} parent=1 // pred_check_branch
      %287 = sbr.rel (0) target = $region21
    $region20: #{tpu_custom_call.1} parent=1 // pred_region
      %s289 = ssub.s32 64, 64
      %290 = vsyncadd [#allocation4], %s289
      %s292 = sshll.u32 [#allocation7], 4
      %s293 = int_to_ptr.vmem [resolvable:$true] %s292
      %295 = dma.vmem_to_hbm [thread:$0]  %s293, 64, %s2, [#allocation4]
    $region21: #{tpu_custom_call.1} parent=1 // pred_fallthru
      _
    // Predicated region
    $region22: #{tpu_custom_call.1} parent=1 // pred_check
      _
    $region23: #{tpu_custom_call.1} parent=1 // pred_check_branch
      %297 = sbr.rel (0) target = $region25
    $region24: #{tpu_custom_call.1} parent=1 // pred_region
      %298 = dma.done [#allocation4], 64
    $region25: #{tpu_custom_call.1} parent=1 // pred_fallthru
      _
    %299 = vsyncpa [#allocation3], 1
    %300 = vsyncpa [#allocation6], 1
    %301 = vsyncpa [#allocation4], 1

</llo_original>
